<compile_context>
chip_gen: v7x
topology: tpu7x:2x2x1
jax: 0.10.0
libtpu: 0.0.40
codegen_flags: <defaults>
</compile_context>

<pallas_src>
import math
import jax
import jax.numpy as jnp
from jax.experimental import pallas as pl
from jax.experimental.pallas import tpu as pltpu


def _init_prev_kernel(q_ref, qm_ref, wuT_ref, bias_ref, lin_w_ref, lin_b_ref,
                      gsum_ref, sel_ref, out_ref):
    """One grid step = Bt batch elements, laid out as (Bt*L, H) rows."""
    q = q_ref[...]                                                   # (Bt*L, H)

    # Wu linear with the batch-invariant Vr_enc folded into the bias (MXU + VPU + EUP).
    s = jnp.tanh(
        jnp.dot(q, wuT_ref[...], preferred_element_type=jnp.float32) + bias_ref[...]
    )                                                                # (Bt*L, H)

    # Scoring linear -> one logit per (batch, position) row (lane reduce).
    logits = jnp.sum(s * lin_w_ref[...], axis=1, keepdims=True) + lin_b_ref[...]  # (Bt*L, 1)

    # Masked softmax over each batch's L positions. Softmax is shift-invariant, so one
    # global max is a valid stabilizer, and the plain-softmax denominator cancels
    # against padded_attn's renormalization -> only one grouped sum is needed.
    e = jnp.exp(logits - jnp.max(logits, axis=0, keepdims=True))
    num = e * qm_ref[...]                                            # (Bt*L, 1)
    denom = jnp.dot(gsum_ref[...], num, preferred_element_type=jnp.float32)  # per-row group sum
    alpha = num * pl.reciprocal(denom, approx=True)                  # (Bt*L, 1)

    # Attention-weighted rows, then PyTorch's raw .view(batch, -1, qry_len).sum(dim=2):
    # with H % L == 0 this is a sum over consecutive lane groups of size L, i.e. one
    # selection matmul (replaces the old L-iteration loop of single-row matmuls).
    out_ref[...] = jnp.dot(alpha * q, sel_ref[...], preferred_element_type=jnp.float32)


def init_prev_pallas(qry_h, qm, params, *, batch_tile=8):
    wu_w, wu_b, wv_w, wv_b, lin_w, lin_b = params
    B, L, H = qry_h.shape
    # TODO(synk): when hidden_dim % qry_len != 0 the raw-view windows straddle rows and
    # need the full (L*H, H) selection path; only the H % L == 0 case is implemented.
    assert H % L == 0, "kernel requires hidden_dim % qry_len == 0"

    Bt = min(batch_tile, B)
    nb = -(-B // Bt)
    B_pad = nb * Bt
    assert nb == 1 or (Bt * L) % 8 == 0, "block sublane count must be a multiple of 8"

    qry_h = qry_h.astype(jnp.float32)
    qm = qm.astype(jnp.float32)
    if B_pad != B:
        qry_h = jnp.pad(qry_h, ((0, B_pad - B), (0, 0), (0, 0)))
        qm = jnp.pad(qm, ((0, B_pad - B), (0, 0)), constant_values=1.0)  # keep pad rows finite

    # ---- glue: free reshapes / parameter prep (all outside the kernel) ----
    q2 = qry_h.reshape(B_pad * L, H)                    # rows = (batch, position)
    qm2 = qm.reshape(B_pad * L, 1)
    wuT = wu_w.T                                        # (H_in, H_out)
    # Vr_enc = ones(L,H) @ Wv^T + bv is the same row for every position -> fused bias.
    fused_bias = (wu_b + wv_w.sum(axis=1) + wv_b).reshape(1, H)
    lin_w2 = lin_w.reshape(1, H)
    lin_b2 = lin_b.reshape(1, 1)
    # Block-diagonal 0/1 matrix: per-row sum over that row's own batch group of L rows.
    r = jnp.arange(Bt * L)
    gsum = (r[:, None] // L == r[None, :] // L).astype(jnp.float32)          # (Bt*L, Bt*L)
    # Selection matrix for the raw .view(B, H, L).sum(-1): sums lane groups of size L.
    sel = (jnp.arange(H)[:, None] // L == jnp.arange(H // L)[None, :]).astype(jnp.float32)

    out2 = pl.pallas_call(
        _init_prev_kernel,
        grid=(nb,),
        in_specs=[
            pl.BlockSpec((Bt * L, H), lambda i: (i, 0)),       # qry_h rows
            pl.BlockSpec((Bt * L, 1), lambda i: (i, 0)),       # mask rows
            pl.BlockSpec((H, H), lambda i: (0, 0)),            # Wu^T (resident)
            pl.BlockSpec((1, H), lambda i: (0, 0)),            # fused bias
            pl.BlockSpec((1, H), lambda i: (0, 0)),            # scoring weight
            pl.BlockSpec((1, 1), lambda i: (0, 0)),            # scoring bias
            pl.BlockSpec((Bt * L, Bt * L), lambda i: (0, 0)),  # group-sum matrix
            pl.BlockSpec((H, H // L), lambda i: (0, 0)),       # view-sum selection
        ],
        out_specs=pl.BlockSpec((Bt * L, H // L), lambda i: (i, 0)),
        out_shape=jax.ShapeDtypeStruct((B_pad * L, H // L), jnp.float32),
        compiler_params=pltpu.CompilerParams(
            dimension_semantics=("parallel",),   # batch tiles are independent -> 2 TCs on v7x
        ),
    )(q2, qm2, wuT, fused_bias, lin_w2, lin_b2, gsum, sel)

    # Free row-major reinterpretation: (B*L, H//L) -> (B, H), exactly matching
    # PyTorch's .view(batch, -1, qry_len).sum(dim=2) output ordering.
    return out2[: B * L].reshape(B, H)


def init_prev_ref(qry_h, qm, params):
    """Pure-JAX reference mirroring the PyTorch forward exactly."""
    wu_w, wu_b, wv_w, wv_b, lin_w, lin_b = params
    B, L, H = qry_h.shape
    qry_enc = qry_h @ wu_w.T + wu_b
    vr = jnp.ones((L, H), jnp.float32)
    vr_enc = vr @ wv_w.T + wv_b
    s = jnp.tanh(qry_enc + vr_enc[None])
    logits = (s.reshape(-1, H) @ lin_w.T + lin_b).reshape(B, L)
    alpha = jax.nn.softmax(logits, axis=1)
    alpha = alpha * qm
    alpha = alpha / alpha.sum(axis=1, keepdims=True)
    weighted = alpha[:, :, None] * qry_h
    return weighted.reshape(B, H, L).sum(axis=-1)


if __name__ == "__main__":
    B, L, H = 2, 8, 32
    key = jax.random.PRNGKey(0)
    kq, k1, k2, k3, k4, k5, k6 = jax.random.split(key, 7)
    bound = 1.0 / math.sqrt(H)
    wu_w = jax.random.uniform(k1, (H, H), jnp.float32, -bound, bound)
    wu_b = jax.random.uniform(k2, (H,), jnp.float32, -bound, bound)
    wv_w = jax.random.uniform(k3, (H, H), jnp.float32, -bound, bound)
    wv_b = jax.random.uniform(k4, (H,), jnp.float32, -bound, bound)
    lin_w = jax.random.uniform(k5, (1, H), jnp.float32, -bound, bound)
    lin_b = jax.random.uniform(k6, (1,), jnp.float32, -bound, bound)
    params = (wu_w, wu_b, wv_w, wv_b, lin_w, lin_b)

    qry_h = jax.random.normal(kq, (B, L, H), jnp.float32)
    qm = jnp.array([[1, 1, 1, 1, 1, 1, 0, 0],
                    [1, 1, 1, 1, 1, 1, 1, 1]], jnp.float32)   # padding mask (B, L)

    out = init_prev_pallas(qry_h, qm, params)
    out = jax.block_until_ready(out)

    ref = init_prev_ref(qry_h, qm, params)
    assert out.shape == (B, H), out.shape
    assert jnp.allclose(out, ref, rtol=2e-2, atol=2e-2), (out, ref)
    print("KERNEL_OK")
</pallas_src>

<mosaic_0001>
module attributes {stable_mosaic.version = 11 : i64} {
  func.func @_init_prev_kernel(%arg0: i32, %arg1: memref<16x32xf32, #tpu.memory_space<vmem>>, %arg2: memref<16x1xf32, #tpu.memory_space<vmem>>, %arg3: memref<32x32xf32, #tpu.memory_space<vmem>>, %arg4: memref<1x32xf32, #tpu.memory_space<vmem>>, %arg5: memref<1x32xf32, #tpu.memory_space<vmem>>, %arg6: memref<1x1xf32, #tpu.memory_space<vmem>>, %arg7: memref<16x16xf32, #tpu.memory_space<vmem>>, %arg8: memref<32x4xf32, #tpu.memory_space<vmem>>, %arg9: memref<16x4xf32, #tpu.memory_space<vmem>>) attributes {dimension_semantics = [#tpu.dimension_semantics<parallel>], iteration_bounds = array<i64: 1>, scalar_prefetch = 0 : i64, scratch_operands = 0 : i64, tpu.core_type = #tpu.core_type<tc>, window_params = [{transform_indices = @transform_0, window_bounds = array<i64: 16, 32>}, {transform_indices = @transform_1, window_bounds = array<i64: 16, 1>}, {pipeline_mode = #tpu.pipeline_mode<synchronous>, transform_indices = @transform_2, window_bounds = array<i64: 32, 32>}, {pipeline_mode = #tpu.pipeline_mode<synchronous>, transform_indices = @transform_3, window_bounds = array<i64: 1, 32>}, {pipeline_mode = #tpu.pipeline_mode<synchronous>, transform_indices = @transform_4, window_bounds = array<i64: 1, 32>}, {pipeline_mode = #tpu.pipeline_mode<synchronous>, transform_indices = @transform_5, window_bounds = array<i64: 1, 1>}, {pipeline_mode = #tpu.pipeline_mode<synchronous>, transform_indices = @transform_6, window_bounds = array<i64: 16, 16>}, {pipeline_mode = #tpu.pipeline_mode<synchronous>, transform_indices = @transform_7, window_bounds = array<i64: 32, 4>}, {transform_indices = @transform_8, window_bounds = array<i64: 16, 4>}]} {
    %c0 = arith.constant 0 : index
    %c0_0 = arith.constant 0 : index
    %0 = vector.load %arg1[%c0, %c0_0] : memref<16x32xf32, #tpu.memory_space<vmem>>, vector<16x32xf32>
    %c0_1 = arith.constant 0 : index
    %c0_2 = arith.constant 0 : index
    %1 = vector.load %arg3[%c0_1, %c0_2] : memref<32x32xf32, #tpu.memory_space<vmem>>, vector<32x32xf32>
    %cst = arith.constant dense<0.000000e+00> : vector<16x32xf32>
    %2 = tpu.matmul %0, %1, %cst {dimension_numbers = #tpu.dot_dimension_numbers<[1], [0], [0], [1], [0, 0, 1, 1], [], []>} : vector<16x32xf32>, vector<32x32xf32>, vector<16x32xf32> -> vector<16x32xf32>
    %c0_3 = arith.constant 0 : index
    %c0_4 = arith.constant 0 : index
    %3 = vector.load %arg4[%c0_3, %c0_4] : memref<1x32xf32, #tpu.memory_space<vmem>>, vector<1x32xf32>
    %4 = vector.broadcast %3 : vector<1x32xf32> to vector<16x32xf32>
    %5 = arith.addf %2, %4 : vector<16x32xf32>
    %6 = math.tanh %5 : vector<16x32xf32>
    %c0_5 = arith.constant 0 : index
    %c0_6 = arith.constant 0 : index
    %7 = vector.load %arg5[%c0_5, %c0_6] : memref<1x32xf32, #tpu.memory_space<vmem>>, vector<1x32xf32>
    %8 = vector.broadcast %7 : vector<1x32xf32> to vector<16x32xf32>
    %9 = arith.mulf %6, %8 : vector<16x32xf32>
    %cst_7 = arith.constant dense<0.000000e+00> : vector<16xf32>
    %10 = vector.multi_reduction <add>, %9, %cst_7 [1] : vector<16x32xf32> to vector<16xf32>
    %11 = vector.shape_cast %10 : vector<16xf32> to vector<16x1xf32>
    %c0_8 = arith.constant 0 : index
    %c0_9 = arith.constant 0 : index
    %12 = vector.load %arg6[%c0_8, %c0_9] : memref<1x1xf32, #tpu.memory_space<vmem>>, vector<1x1xf32>
    %13 = vector.broadcast %12 : vector<1x1xf32> to vector<16x1xf32>
    %14 = arith.addf %11, %13 : vector<16x1xf32>
    %cst_10 = arith.constant dense<0xFF800000> : vector<1xf32>
    %15 = vector.multi_reduction <maximumf>, %14, %cst_10 [0] : vector<16x1xf32> to vector<1xf32>
    %16 = vector.shape_cast %15 : vector<1xf32> to vector<1x1xf32>
    %17 = vector.broadcast %16 : vector<1x1xf32> to vector<16x1xf32>
    %18 = arith.subf %14, %17 : vector<16x1xf32>
    %19 = math.exp %18 : vector<16x1xf32>
    %c0_11 = arith.constant 0 : index
    %c0_12 = arith.constant 0 : index
    %20 = vector.load %arg2[%c0_11, %c0_12] : memref<16x1xf32, #tpu.memory_space<vmem>>, vector<16x1xf32>
    %21 = arith.mulf %19, %20 : vector<16x1xf32>
    %c0_13 = arith.constant 0 : index
    %c0_14 = arith.constant 0 : index
    %22 = vector.load %arg7[%c0_13, %c0_14] : memref<16x16xf32, #tpu.memory_space<vmem>>, vector<16x16xf32>
    %cst_15 = arith.constant dense<0.000000e+00> : vector<16x1xf32>
    %23 = tpu.matmul %22, %21, %cst_15 {dimension_numbers = #tpu.dot_dimension_numbers<[1], [0], [0], [1], [0, 0, 1, 1], [], []>} : vector<16x16xf32>, vector<16x1xf32>, vector<16x1xf32> -> vector<16x1xf32>
    %24 = tpu.reciprocal %23 {approx = true} : vector<16x1xf32> -> vector<16x1xf32>
    %25 = arith.mulf %21, %24 : vector<16x1xf32>
    %26 = vector.broadcast %25 : vector<16x1xf32> to vector<16x32xf32>
    %27 = arith.mulf %26, %0 : vector<16x32xf32>
    %c0_16 = arith.constant 0 : index
    %c0_17 = arith.constant 0 : index
    %28 = vector.load %arg8[%c0_16, %c0_17] : memref<32x4xf32, #tpu.memory_space<vmem>>, vector<32x4xf32>
    %cst_18 = arith.constant dense<0.000000e+00> : vector<16x4xf32>
    %29 = tpu.matmul %27, %28, %cst_18 {dimension_numbers = #tpu.dot_dimension_numbers<[1], [0], [0], [1], [0, 0, 1, 1], [], []>} : vector<16x32xf32>, vector<32x4xf32>, vector<16x4xf32> -> vector<16x4xf32>
    %c0_19 = arith.constant 0 : index
    %c0_20 = arith.constant 0 : index
    %30 = vector.load %arg9[%c0_19, %c0_20] : memref<16x4xf32, #tpu.memory_space<vmem>>, vector<16x4xf32>
    tpu.vector_store %arg9[%c0_19, %c0_20], %29 {strides = array<i32>} : memref<16x4xf32, #tpu.memory_space<vmem>>, vector<16x4xf32>,
    return
  }
  func.func @transform_0(%arg0: i32) -> (i32, i32) {
    %c0_i32 = arith.constant 0 : i32
    %c0_i32_0 = arith.constant 0 : i32
    return %arg0, %c0_i32 : i32, i32
  }
  func.func @transform_1(%arg0: i32) -> (i32, i32) {
    %c0_i32 = arith.constant 0 : i32
    %c0_i32_0 = arith.constant 0 : i32
    return %arg0, %c0_i32 : i32, i32
  }
  func.func @transform_2(%arg0: i32) -> (i32, i32) {
    %c0_i32 = arith.constant 0 : i32
    %c0_i32_0 = arith.constant 0 : i32
    %c0_i32_1 = arith.constant 0 : i32
    return %c0_i32, %c0_i32_0 : i32, i32
  }
  func.func @transform_3(%arg0: i32) -> (i32, i32) {
    %c0_i32 = arith.constant 0 : i32
    %c0_i32_0 = arith.constant 0 : i32
    %c0_i32_1 = arith.constant 0 : i32
    return %c0_i32, %c0_i32_0 : i32, i32
  }
  func.func @transform_4(%arg0: i32) -> (i32, i32) {
    %c0_i32 = arith.constant 0 : i32
    %c0_i32_0 = arith.constant 0 : i32
    %c0_i32_1 = arith.constant 0 : i32
    return %c0_i32, %c0_i32_0 : i32, i32
  }
  func.func @transform_5(%arg0: i32) -> (i32, i32) {
    %c0_i32 = arith.constant 0 : i32
    %c0_i32_0 = arith.constant 0 : i32
    %c0_i32_1 = arith.constant 0 : i32
    return %c0_i32, %c0_i32_0 : i32, i32
  }
  func.func @transform_6(%arg0: i32) -> (i32, i32) {
    %c0_i32 = arith.constant 0 : i32
    %c0_i32_0 = arith.constant 0 : i32
    %c0_i32_1 = arith.constant 0 : i32
    return %c0_i32, %c0_i32_0 : i32, i32
  }
  func.func @transform_7(%arg0: i32) -> (i32, i32) {
    %c0_i32 = arith.constant 0 : i32
    %c0_i32_0 = arith.constant 0 : i32
    %c0_i32_1 = arith.constant 0 : i32
    return %c0_i32, %c0_i32_0 : i32, i32
  }
  func.func @transform_8(%arg0: i32) -> (i32, i32) {
    %c0_i32 = arith.constant 0 : i32
    %c0_i32_0 = arith.constant 0 : i32
    return %arg0, %c0_i32 : i32, i32
  }
}

</mosaic_0001>

<llo_original>
// kernel: tpu_custom_call.1
$region0: #{tpu_custom_call.1}
  #allocation0 [shape = 'u32[]', space=smem, size = 0x4, offset = 0x4, fixed_abs, tag = 'smem constant byte address 0x4 - core index']
  #allocation1 [shape = 'u32[144,128]{1,0:T(1,128)}', space=vmem, size = 0x12000, scoped, tag = 'internal scratch']
  #allocation2 [shape = 'f32[1,1]{1,0:T(1,128)S(1)}', space=vmem, size = 0x200, scoped, tag = 'scoped memory for tpu_custom_call.1']
  %s0 = inlined_call_operand.vmem [shape: f32[16,32], index: 0, kind: input, shape index: {}]
  %s1 = inlined_call_operand.vmem [shape: f32[16,1], index: 1, kind: input, shape index: {}]
  %s2 = inlined_call_operand.vmem [shape: f32[32,32], index: 2, kind: input, shape index: {}]
  %s3 = inlined_call_operand.hbm [shape: f32[1,32], index: 3, kind: input, shape index: {}]
  %s4 = inlined_call_operand.vmem [shape: f32[1,32], index: 4, kind: input, shape index: {}]
  %s5 = inlined_call_operand.<no memory space> [shape: f32[1,1], index: 5, kind: input, shape index: {}]
  %s6 = inlined_call_operand.vmem [shape: f32[16,16], index: 6, kind: input, shape index: {}]
  %s7 = inlined_call_operand.vmem [shape: f32[32,4], index: 7, kind: input, shape index: {}]
  %s8 = inlined_call_operand.vmem [shape: f32[16,4], index: 8, kind: output, shape index: {}]
  %s9 = sld [smem:[#allocation0]]
  $region46: #{tpu_custom_call.1} parent=0
    _
  %s11 = ssub.s32 1, %s9
  %s12 = scalar_select 0, %s11, %s9
  %v13 = vstv %s5
  %14 = vst [vmem:[#allocation2] sm:$0x1] %v13
  $region1: #{tpu_custom_call.1} parent=0
    #allocation3 [shape = 'u8[512]{0}', space=vmem, size = 0x400, scoped, tag = 'input window, operand 3, single buffered']
    #allocation4 [shape = 's32[1]{0}', space=sflag, size = 0x4, scoped, tag = 'scoped memory for tpu_custom_call.1']
    %15 = vsyncpa [#allocation4], 0
    // Predicated region
    $region2: #{tpu_custom_call.1} parent=1 // pred_check
      _
    $region3: #{tpu_custom_call.1} parent=1 // pred_check_branch
      %17 = sbr.rel (0) target = $region5
    $region4: #{tpu_custom_call.1} parent=1 // pred_region
      _
    $region5: #{tpu_custom_call.1} parent=1 // pred_fallthru
      _
    // Predicated region
    $region6: #{tpu_custom_call.1} parent=1 // pred_check
      _
    $region7: #{tpu_custom_call.1} parent=1 // pred_check_branch
      %19 = sbr.rel (0) target = $region9
    $region8: #{tpu_custom_call.1} parent=1 // pred_region
      _
    $region9: #{tpu_custom_call.1} parent=1 // pred_fallthru
      _
    // Predicated region
    $region10: #{tpu_custom_call.1} parent=1 // pred_check
      _
    $region11: #{tpu_custom_call.1} parent=1 // pred_check_branch
      %21 = sbr.rel (0) target = $region13
    $region12: #{tpu_custom_call.1} parent=1 // pred_region
      _
    $region13: #{tpu_custom_call.1} parent=1 // pred_fallthru
      _
    // Predicated region
    $region14: #{tpu_custom_call.1} parent=1 // pred_check
      _
    $region15: #{tpu_custom_call.1} parent=1 // pred_check_branch
      %23 = sbr.rel (0) target = $region17
    $region16: #{tpu_custom_call.1} parent=1 // pred_region
      %s25 = ssub.s32 16, 16
      %26 = vsyncadd [#allocation4], %s25
      %s28 = sshll.u32 [#allocation3], 4
      %s29 = int_to_ptr.vmem [resolvable:$true] %s28
      %31 = dma.hbm_to_vmem [thread:$0]  %s3, 16, %s29, [#allocation4]
    $region17: #{tpu_custom_call.1} parent=1 // pred_fallthru
      _
    // Predicated region
    $region18: #{tpu_custom_call.1} parent=1 // pred_check
      _
    $region19: #{tpu_custom_call.1} parent=1 // pred_check_branch
      %33 = sbr.rel (0) target = $region21
    $region20: #{tpu_custom_call.1} parent=1 // pred_region
      _
    $region21: #{tpu_custom_call.1} parent=1 // pred_fallthru
      _
    // Predicated region
    $region22: #{tpu_custom_call.1} parent=1 // pred_check
      _
    $region23: #{tpu_custom_call.1} parent=1 // pred_check_branch
      %35 = sbr.rel (0) target = $region25
    $region24: #{tpu_custom_call.1} parent=1 // pred_region
      _
    $region25: #{tpu_custom_call.1} parent=1 // pred_fallthru
      _
    // Predicated region
    $region26: #{tpu_custom_call.1} parent=1 // pred_check
      _
    $region27: #{tpu_custom_call.1} parent=1 // pred_check_branch
      %37 = sbr.rel (0) target = $region29
    $region28: #{tpu_custom_call.1} parent=1 // pred_region
      _
    $region29: #{tpu_custom_call.1} parent=1 // pred_fallthru
      _
    // Predicated region
    $region30: #{tpu_custom_call.1} parent=1 // pred_check
      _
    $region31: #{tpu_custom_call.1} parent=1 // pred_check_branch
      %39 = sbr.rel (0) target = $region33
    $region32: #{tpu_custom_call.1} parent=1 // pred_region
      _
    $region33: #{tpu_custom_call.1} parent=1 // pred_fallthru
      _
    // Predicated region
    $region34: #{tpu_custom_call.1} parent=1 // pred_check
      _
    $region35: #{tpu_custom_call.1} parent=1 // pred_check_branch
      %41 = sbr.rel (0) target = $region37
    $region36: #{tpu_custom_call.1} parent=1 // pred_region
      %42 = dma.done [#allocation4], 16
    $region37: #{tpu_custom_call.1} parent=1 // pred_fallthru
      _
    %v43 = vld [vmem:[%s0] sm:$0xff]
    %v44 = vld [vmem:[%s0 + $0x8] sm:$0xff]
    %v45 = vld [vmem:[%s2] sm:$0xff]
    %v46 = vld [vmem:[%s2 + $0x8] sm:$0xff]
    %v47 = vld [vmem:[%s2 + $0x10] sm:$0xff]
    %v48 = vld [vmem:[%s2 + $0x18] sm:$0xff]
    %v49 = vld [vmem:[#allocation3] sm:$0x1]
    %v51 = vlaneseq
    %v52 = vshrl.u32 %v51, 7
    %v53 = vsub.s32 0, %v52
    %v54 = vrot.slane %v49, %v53
    %vm56 = vcmask 261120
    %v58 = vsel %vm56, %v43, 0
    %v61 = vsel %vm56, %v44, 0
    %63 = vmatprep.subr.mxu0 0.0
    %64 = vmatpush1.msra.mxu0 %v45
    %65 = vmatprep.subr.mxu0 0.0
    %66 = vmatpush1.msra.mxu0 %v46
    %67 = vmatprep.subr.mxu0 0.0
    %68 = vmatpush1.msra.mxu0 %v47
    %69 = vmatprep.subr.mxu0 0.0
    %70 = vmatpush1.msra.mxu0 %v48
    %71 = vmatprep.subr.mxu0 0.0
    %72 = vmatpush1.msra.mxu0 0.0
    %73 = vmatprep.subr.mxu0 0.0
    %74 = vmatpush1.msra.mxu0 0.0
    %75 = vmatprep.subr.mxu0 0.0
    %76 = vmatpush1.msra.mxu0 0.0
    %77 = vmatprep.subr.mxu0 0.0
    %78 = vmatpush1.msra.mxu0 0.0
    %79 = vmatprep.subr.mxu0 0.0
    %80 = vmatpush1.msra.mxu0 0.0
    %81 = vmatprep.subr.mxu0 0.0
    %82 = vmatpush1.msra.mxu0 0.0
    %83 = vmatprep.subr.mxu0 0.0
    %84 = vmatpush1.msra.mxu0 0.0
    %85 = vmatprep.subr.mxu0 0.0
    %86 = vmatpush1.msra.mxu0 0.0
    %87 = vmatprep.subr.mxu0 0.0
    %88 = vmatpush1.msra.mxu0 0.0
    %89 = vmatprep.subr.mxu0 0.0
    %90 = vmatpush1.msra.mxu0 0.0
    %91 = vmatprep.subr.mxu0 0.0
    %92 = vmatpush1.msra.mxu0 0.0
    %93 = vmatprep.subr.mxu0 0.0
    %94 = vmatpush1.msra.mxu0 0.0
    %95 = vmatprep.subr.mxu0 0.0
    %96 = vmatpush1.msra.mxu0 0.0
    %97 = vmatprep.subr.mxu0 0.0
    %98 = vmatpush1.msra.mxu0 0.0
    %99 = vmatprep.subr.mxu0 0.0
    %100 = vmatpush1.msra.mxu0 0.0
    %101 = vmatprep.subr.mxu0 0.0
    %102 = vmatpush1.msra.mxu0 0.0
    %103 = vmatprep.subr.mxu0 0.0
    %104 = vmatpush1.msra.mxu0 0.0
    %105 = vmatprep.subr.mxu0 0.0
    %106 = vmatpush1.msra.mxu0 0.0
    %107 = vmatprep.subr.mxu0 0.0
    %108 = vmatpush1.msra.mxu0 0.0
    %109 = vmatprep.subr.mxu0 0.0
    %110 = vmatpush1.msra.mxu0 0.0
    %111 = vmatprep.subr.mxu0 0.0
    %112 = vmatpush1.msra.mxu0 0.0
    %113 = vmatprep.subr.mxu0 0.0
    %114 = vmatpush1.msra.mxu0 0.0
    %115 = vmatprep.subr.mxu0 0.0
    %116 = vmatpush1.msra.mxu0 0.0
    %117 = vmatprep.subr.mxu0 0.0
    %118 = vmatpush1.msra.mxu0 0.0
    %119 = vmatprep.subr.mxu0 0.0
    %120 = vmatpush1.msra.mxu0 0.0
    %121 = vmatprep.subr.mxu0 0.0
    %122 = vmatpush1.msra.mxu0 0.0
    %123 = vmatprep.subr.mxu0 0.0
    %124 = vmatpush1.msra.mxu0 0.0
    %125 = vmatprep.subr.mxu0 0.0
    %126 = vmatpush1.msra.mxu0 0.0
    %127 = vmatprep.mubr.f32.mxu0 0.0
    %128 = vmatmul.mubr.f32.gmra.mrb[0].mxu0 %v58
    %v129 = vpop.f32.mrb[0].mxu0
    %v130 = vadd.f32 %v54, %v129
    %v131 = vpop.f32.mrb[0].mxu0
    %132 = vmatprep.mubr.f32.mxu0 0.0
    %133 = vmatmul.mubr.f32.gmra.mrb[0].mxu0 %v61
    %v134 = vpop.f32.mrb[0].mxu0
    %v135 = vadd.f32 %v54, %v134
    %v136 = vpop.f32.mrb[0].mxu0
    %137 = vdwg.mxu0
    %v138 = vtanh.pop %v130
    %v139 = vtanh.pop %v135
    %v140 = vld [vmem:[%s4] sm:$0x1]
    %v142 = vlaneseq
    %v143 = vshrl.u32 %v142, 7
    %v144 = vsub.s32 0, %v143
    %v145 = vrot.slane %v140, %v144
    %v147 = vmul.f32 %v138, %v145
    %v148 = vmul.f32 %v139, %v145
    %v149 = vsel %vm56, %v147, 0.0
    %150 = vadd.xlane.f32.xlu0 %v149
    %v151 = vpop.xlane.xlu0 %150
    %v152 = vsel %vm56, %v148, 0.0
    %153 = vadd.xlane.f32.xlu0 %v152
    %v154 = vpop.xlane.xlu0 %153
    %v155 = vld [vmem:[#allocation2] sm:$0x1]
    %v157 = vlaneseq
    %v158 = vshrl.u32 %v157, 7
    %v159 = vsub.s32 0, %v158
    %v160 = vrot.slane %v155, %v159
    %v162 = vadd.f32 %v151, %v160
    %v163 = vadd.f32 %v154, %v160
    %vm164 = vcmask 7168
    %v165 = vsel %vm164, %v162, -inf
    %v166 = vsel %vm164, %v163, -inf
    %v167 = vmax.f32 %v165, %v166
    %v168 = vrot.slane %v167, 4
    %v169 = vmax.f32 %v167, %v168
    %v170 = vrot.slane %v169, 2
    %v171 = vmax.f32 %v169, %v170
    %v172 = vrot.slane %v171, 1
    %v173 = vmax.f32 %v171, %v172
    %v174 = vsub.f32 %v162, %v173
    %v175 = vsub.f32 %v163, %v173
    %v176 = vmul.f32 %v174, 1.442695
    %v177 = vpow.pop %v176
    %v178 = vmul.f32 %v175, 1.442695
    %v179 = vpow.pop %v178
    %v180 = vld [vmem:[%s1] sm:$0xff]
    %v181 = vld [vmem:[%s1 + $0x8] sm:$0xff]
    %v182 = vmul.f32 %v177, %v180
    %v183 = vmul.f32 %v179, %v181
    %v184 = vld [vmem:[%s6] sm:$0xff]
    %v185 = vld [vmem:[%s6 + $0x8] sm:$0xff]
    %vm186 = vcmask 130048
    %v188 = vsel %vm186, %v184, 0
    %v191 = vsel %vm186, %v185, 0
    %193 = vmatprep.subr.mxu0 0.0
    %194 = vmatpush1.msra.mxu0 %v182
    %195 = vmatprep.subr.mxu0 0.0
    %196 = vmatpush1.msra.mxu0 %v183
    %197 = vmatprep.subr.mxu0 0.0
    %198 = vmatpush1.msra.mxu0 0.0
    %199 = vmatprep.subr.mxu0 0.0
    %200 = vmatpush1.msra.mxu0 0.0
    %201 = vmatprep.subr.mxu0 0.0
    %202 = vmatpush1.msra.mxu0 0.0
    %203 = vmatprep.subr.mxu0 0.0
    %204 = vmatpush1.msra.mxu0 0.0
    %205 = vmatprep.subr.mxu0 0.0
    %206 = vmatpush1.msra.mxu0 0.0
    %207 = vmatprep.subr.mxu0 0.0
    %208 = vmatpush1.msra.mxu0 0.0
    %209 = vmatprep.subr.mxu0 0.0
    %210 = vmatpush1.msra.mxu0 0.0
    %211 = vmatprep.subr.mxu0 0.0
    %212 = vmatpush1.msra.mxu0 0.0
    %213 = vmatprep.subr.mxu0 0.0
    %214 = vmatpush1.msra.mxu0 0.0
    %215 = vmatprep.subr.mxu0 0.0
    %216 = vmatpush1.msra.mxu0 0.0
    %217 = vmatprep.subr.mxu0 0.0
    %218 = vmatpush1.msra.mxu0 0.0
    %219 = vmatprep.subr.mxu0 0.0
    %220 = vmatpush1.msra.mxu0 0.0
    %221 = vmatprep.subr.mxu0 0.0
    %222 = vmatpush1.msra.mxu0 0.0
    %223 = vmatprep.subr.mxu0 0.0
    %224 = vmatpush1.msra.mxu0 0.0
    %225 = vmatprep.subr.mxu0 0.0
    %226 = vmatpush1.msra.mxu0 0.0
    %227 = vmatprep.subr.mxu0 0.0
    %228 = vmatpush1.msra.mxu0 0.0
    %229 = vmatprep.subr.mxu0 0.0
    %230 = vmatpush1.msra.mxu0 0.0
    %231 = vmatprep.subr.mxu0 0.0
    %232 = vmatpush1.msra.mxu0 0.0
    %233 = vmatprep.subr.mxu0 0.0
    %234 = vmatpush1.msra.mxu0 0.0
    %235 = vmatprep.subr.mxu0 0.0
    %236 = vmatpush1.msra.mxu0 0.0
    %237 = vmatprep.subr.mxu0 0.0
    %238 = vmatpush1.msra.mxu0 0.0
    %239 = vmatprep.subr.mxu0 0.0
    %240 = vmatpush1.msra.mxu0 0.0
    %241 = vmatprep.subr.mxu0 0.0
    %242 = vmatpush1.msra.mxu0 0.0
    %243 = vmatprep.subr.mxu0 0.0
    %244 = vmatpush1.msra.mxu0 0.0
    %245 = vmatprep.subr.mxu0 0.0
    %246 = vmatpush1.msra.mxu0 0.0
    %247 = vmatprep.subr.mxu0 0.0
    %248 = vmatpush1.msra.mxu0 0.0
    %249 = vmatprep.subr.mxu0 0.0
    %250 = vmatpush1.msra.mxu0 0.0
    %251 = vmatprep.subr.mxu0 0.0
    %252 = vmatpush1.msra.mxu0 0.0
    %253 = vmatprep.subr.mxu0 0.0
    %254 = vmatpush1.msra.mxu0 0.0
    %255 = vmatprep.subr.mxu0 0.0
    %256 = vmatpush1.msra.mxu0 0.0
    %257 = vmatprep.mubr.f32.mxu0 0.0
    %258 = vmatmul.mubr.f32.gmra.mrb[0].mxu0 %v188
    %v259 = vpop.f32.mrb[0].mxu0
    %v260 = vadd.f32 0.0, %v259
    %v261 = vpop.f32.mrb[0].mxu0
    %262 = vmatprep.mubr.f32.mxu0 0.0
    %263 = vmatmul.mubr.f32.gmra.mrb[0].mxu0 %v191
    %v264 = vpop.f32.mrb[0].mxu0
    %v265 = vadd.f32 0.0, %v264
    %v266 = vpop.f32.mrb[0].mxu0
    %267 = vdwg.mxu0
    %v268 = vrcp.pop %v260
    %v269 = vrcp.pop %v265
    %v270 = vmul.f32 %v182, %v268
    %v271 = vmul.f32 %v183, %v269
    %273 = vset.pattern.permute.xlu0 0
    %274 = vperm.xlu0 %273, %v270
    %v275 = vpop.permute.xlu0 %274
    %278 = vset.pattern.permute.xlu0 0
    %279 = vperm.xlu0 %278, %v271
    %v280 = vpop.permute.xlu0 %279
    %v282 = vmul.f32 %v275, %v43
    %v283 = vmul.f32 %v280, %v44
    %v284 = vld [vmem:[%s7] sm:$0xff]
    %v285 = vld [vmem:[%s7 + $0x8] sm:$0xff]
    %v286 = vld [vmem:[%s7 + $0x10] sm:$0xff]
    %v287 = vld [vmem:[%s7 + $0x18] sm:$0xff]
    %v289 = vsel %vm56, %v282, 0
    %v292 = vsel %vm56, %v283, 0
    %294 = vmatprep.subr.mxu0 0.0
    %295 = vmatpush1.msra.mxu0 %v284
    %296 = vmatprep.subr.mxu0 0.0
    %297 = vmatpush1.msra.mxu0 %v285
    %298 = vmatprep.subr.mxu0 0.0
    %299 = vmatpush1.msra.mxu0 %v286
    %300 = vmatprep.subr.mxu0 0.0
    %301 = vmatpush1.msra.mxu0 %v287
    %302 = vmatprep.subr.mxu0 0.0
    %303 = vmatpush1.msra.mxu0 0.0
    %304 = vmatprep.subr.mxu0 0.0
    %305 = vmatpush1.msra.mxu0 0.0
    %306 = vmatprep.subr.mxu0 0.0
    %307 = vmatpush1.msra.mxu0 0.0
    %308 = vmatprep.subr.mxu0 0.0
    %309 = vmatpush1.msra.mxu0 0.0
    %310 = vmatprep.subr.mxu0 0.0
    %311 = vmatpush1.msra.mxu0 0.0
    %312 = vmatprep.subr.mxu0 0.0
    %313 = vmatpush1.msra.mxu0 0.0
    %314 = vmatprep.subr.mxu0 0.0
    %315 = vmatpush1.msra.mxu0 0.0
    %316 = vmatprep.subr.mxu0 0.0
    %317 = vmatpush1.msra.mxu0 0.0
    %318 = vmatprep.subr.mxu0 0.0
    %319 = vmatpush1.msra.mxu0 0.0
    %320 = vmatprep.subr.mxu0 0.0
    %321 = vmatpush1.msra.mxu0 0.0
    %322 = vmatprep.subr.mxu0 0.0
    %323 = vmatpush1.msra.mxu0 0.0
    %324 = vmatprep.subr.mxu0 0.0
    %325 = vmatpush1.msra.mxu0 0.0
    %326 = vmatprep.subr.mxu0 0.0
    %327 = vmatpush1.msra.mxu0 0.0
    %328 = vmatprep.subr.mxu0 0.0
    %329 = vmatpush1.msra.mxu0 0.0
    %330 = vmatprep.subr.mxu0 0.0
    %331 = vmatpush1.msra.mxu0 0.0
    %332 = vmatprep.subr.mxu0 0.0
    %333 = vmatpush1.msra.mxu0 0.0
    %334 = vmatprep.subr.mxu0 0.0
    %335 = vmatpush1.msra.mxu0 0.0
    %336 = vmatprep.subr.mxu0 0.0
    %337 = vmatpush1.msra.mxu0 0.0
    %338 = vmatprep.subr.mxu0 0.0
    %339 = vmatpush1.msra.mxu0 0.0
    %340 = vmatprep.subr.mxu0 0.0
    %341 = vmatpush1.msra.mxu0 0.0
    %342 = vmatprep.subr.mxu0 0.0
    %343 = vmatpush1.msra.mxu0 0.0
    %344 = vmatprep.subr.mxu0 0.0
    %345 = vmatpush1.msra.mxu0 0.0
    %346 = vmatprep.subr.mxu0 0.0
    %347 = vmatpush1.msra.mxu0 0.0
    %348 = vmatprep.subr.mxu0 0.0
    %349 = vmatpush1.msra.mxu0 0.0
    %350 = vmatprep.subr.mxu0 0.0
    %351 = vmatpush1.msra.mxu0 0.0
    %352 = vmatprep.subr.mxu0 0.0
    %353 = vmatpush1.msra.mxu0 0.0
    %354 = vmatprep.subr.mxu0 0.0
    %355 = vmatpush1.msra.mxu0 0.0
    %356 = vmatprep.subr.mxu0 0.0
    %357 = vmatpush1.msra.mxu0 0.0
    %358 = vmatprep.mubr.f32.mxu0 0.0
    %359 = vmatmul.mubr.f32.gmra.mrb[0].mxu0 %v289
    %v360 = vpop.f32.mrb[0].mxu0
    %v361 = vadd.f32 0.0, %v360
    %v362 = vpop.f32.mrb[0].mxu0
    %363 = vmatprep.mubr.f32.mxu0 0.0
    %364 = vmatmul.mubr.f32.gmra.mrb[0].mxu0 %v292
    %v365 = vpop.f32.mrb[0].mxu0
    %v366 = vadd.f32 0.0, %v365
    %v367 = vpop.f32.mrb[0].mxu0
    %368 = vdwg.mxu0
    %vm369 = vcmask 31744
    %370 = vst.msk [vmem:[%s8] sm:$0xff] %vm369, %v361
    %371 = vst.msk [vmem:[%s8 + $0x8] sm:$0xff] %vm369, %v366
    // Predicated region
    $region38: #{tpu_custom_call.1} parent=1 // pred_check
      _
    $region39: #{tpu_custom_call.1} parent=1 // pred_check_branch
      %373 = sbr.rel (0) target = $region41
    $region40: #{tpu_custom_call.1} parent=1 // pred_region
      _
    $region41: #{tpu_custom_call.1} parent=1 // pred_fallthru
      _
    // Predicated region
    $region42: #{tpu_custom_call.1} parent=1 // pred_check
      _
    $region43: #{tpu_custom_call.1} parent=1 // pred_check_branch
      %375 = sbr.rel (0) target = $region45
    $region44: #{tpu_custom_call.1} parent=1 // pred_region
      _
    $region45: #{tpu_custom_call.1} parent=1 // pred_fallthru
      _
    %376 = vsyncpa [#allocation4], 1

</llo_original>
